<compile_context>
chip_gen: v5e
topology: v5e:2x2
jax: 0.10.0
libtpu: 0.0.40
codegen_flags: <defaults>
</compile_context>

<pallas_src>
import jax
import jax.numpy as jnp
from jax.experimental import pallas as pl
from jax.experimental.pallas import tpu as pltpu

PAD = 128            # lane width of the padded hidden layers
TILE_N_MAX = 8192    # rows per grid step (large tiles: ~0.35us/step overhead amortised)


def _round_up(v, m):
    return (v + m - 1) // m * m


def _mlp_kernel(x_ref, w1_ref, w_ref, b_ref, w5_ref, b5_ref, o_ref):
    """Fused MLP on one row tile.

    x_ref : (tile_n, F)    f32   row tile of the raw input (F = in_features, unpadded)
    w1_ref: (F, 128)       bf16  layer-1 weight, VMEM-resident
    w_ref : (3, 128, 128)  bf16  layer-2..4 weights, VMEM-resident
    b_ref : (4, 1, 128)    f32   layer-1..4 biases, VMEM-resident
    w5_ref: (1, 128)       f32   layer-5 weight column (transposed), VMEM-resident
    b5_ref: (1, 1)         f32   layer-5 bias, VMEM-resident
    o_ref : (tile_n, 1)    f32   sigmoid output (narrow)
    """
    # Layer 1: bf16 cast done in-kernel; contraction width is the true in_features.
    h = x_ref[...].astype(jnp.bfloat16)
    h = jnp.maximum(
        jnp.dot(h, w1_ref[...], preferred_element_type=jnp.float32) + b_ref[0], 0.0)

    # Layers 2-4 on the MXU: bf16 operands, f32 accumulation / bias / ReLU.
    for i in range(3):
        h = jnp.maximum(
            jnp.dot(h.astype(jnp.bfloat16), w_ref[i],
                    preferred_element_type=jnp.float32) + b_ref[i + 1], 0.0)

    # Layer 5 (128-padded -> 1) off the MXU: VPU multiply + XLU cross-lane reduce.
    z = jnp.sum(h * w5_ref[...], axis=-1, keepdims=True) + b5_ref[...]

    # Sigmoid epilogue: exp on the EUP; exact reciprocal (cheap here) keeps the f32
    # output accurate — remaining error is only the bf16 MXU operands.
    o_ref[...] = pl.reciprocal(1.0 + jnp.exp(-z)).astype(o_ref.dtype)


def prepare_params(params):
    """One-time staging of the 5 Linear layers into kernel-resident operands.

    params: dict of w{i}: [in, out]  (already TRANSPOSED vs nn.Linear's [out, in] —
    the most likely footgun when porting a PyTorch checkpoint) and b{i}: [out].
    """
    w1 = params["w1"].astype(jnp.float32)                                    # (F, 10)
    w1_p = jnp.pad(w1, ((0, 0), (0, PAD - w1.shape[1]))).astype(jnp.bfloat16)  # (F, 128)

    ws = []
    for i in range(2, 5):
        w = params[f"w{i}"].astype(jnp.float32)
        ws.append(jnp.pad(w, ((0, PAD - w.shape[0]), (0, PAD - w.shape[1]))))
    w_stack = jnp.stack(ws).astype(jnp.bfloat16)                             # (3, 128, 128)

    bs = []
    for i in range(1, 5):
        b = params[f"b{i}"].astype(jnp.float32).reshape(1, -1)
        bs.append(jnp.pad(b, ((0, 0), (0, PAD - b.shape[1]))))
    b_stack = jnp.stack(bs)                                                  # (4, 1, 128)

    w5 = params["w5"].astype(jnp.float32)                                    # (5, 1)
    w5t = jnp.pad(w5.T, ((0, 0), (0, PAD - w5.shape[0])))                    # (1, 128)
    b5 = params["b5"].astype(jnp.float32).reshape(1, 1)                      # (1, 1)
    return w1_p, w_stack, b_stack, w5t, b5


def custom_model_forward(x, w1_p, w_stack, b_stack, w5t, b5):
    """x: [N, in_features] f32 -> [N, 1] f32 (Custom_Model forward)."""
    n, f = x.shape

    # Large tiles for DMA efficiency, but cap near ceil(N/2) so the "parallel" grid
    # axis gives both v7x TensorCores work (neutral on single-TC v5e/v6e).
    tile_n = min(TILE_N_MAX, _round_up(max(1, pl.cdiv(n, 2)), 8))
    grid = (pl.cdiv(n, tile_n),)   # ragged last block: OOB rows only hit dropped writes.

    cost = pl.CostEstimate(
        flops=2 * n * (f * PAD + 3 * PAD * PAD + PAD),
        transcendentals=n,
        bytes_accessed=n * f * 4 + n * 4
        + (f * PAD + 3 * PAD * PAD) * 2 + (4 * PAD + PAD + 1) * 4,
    )

    # TODO(synk): for very large N, lane-pack 128 results per output row (XLU transpose
    # of the final tile) to turn the masked 1-lane stores into unmasked full `vst`s.
    return pl.pallas_call(
        _mlp_kernel,
        out_shape=jax.ShapeDtypeStruct((n, 1), jnp.float32),
        grid_spec=pltpu.PrefetchScalarGridSpec(
            num_scalar_prefetch=0,
            grid=grid,
            in_specs=[
                pl.BlockSpec((tile_n, f), lambda i: (i, 0)),       # x: row-tiled, raw f32
                pl.BlockSpec((f, PAD), lambda i: (0, 0)),          # w1: resident
                pl.BlockSpec((3, PAD, PAD), lambda i: (0, 0, 0)),  # w2..w4: resident
                pl.BlockSpec((4, 1, PAD), lambda i: (0, 0, 0)),    # b1..b4: resident
                pl.BlockSpec((1, PAD), lambda i: (0, 0)),          # w5 column: resident
                pl.BlockSpec((1, 1), lambda i: (0, 0)),            # b5: resident
            ],
            out_specs=pl.BlockSpec((tile_n, 1), lambda i: (i, 0)),
        ),
        compiler_params=pltpu.CompilerParams(
            dimension_semantics=("parallel",),   # shard row tiles across v7x's 2 TCs
        ),
        cost_estimate=cost,
    )(x, w1_p, w_stack, b_stack, w5t, b5)


def init_params(key, in_features):
    """Deterministic init mimicking nn.Linear default (uniform +/- 1/sqrt(fan_in))."""
    dims = [in_features, 10, 10, 5, 5, 1]
    params = {}
    for i in range(5):
        fan_in, fan_out = dims[i], dims[i + 1]
        key, kw, kb = jax.random.split(key, 3)
        bound = 1.0 / (fan_in ** 0.5)
        params[f"w{i+1}"] = jax.random.uniform(
            kw, (fan_in, fan_out), jnp.float32, -bound, bound)
        params[f"b{i+1}"] = jax.random.uniform(
            kb, (fan_out,), jnp.float32, -bound, bound)
    return params


def _reference_forward(x, params):
    h = x
    for i in range(1, 5):
        h = jnp.maximum(h @ params[f"w{i}"] + params[f"b{i}"], 0.0)
    z = h @ params["w5"] + params["b5"]
    return jax.nn.sigmoid(z)


if __name__ == "__main__":
    key = jax.random.PRNGKey(0)
    k_x, k_p = jax.random.split(key)

    batch, in_features = 8, 16
    x = jax.random.normal(k_x, (batch, in_features), jnp.float32)
    params = init_params(k_p, in_features)

    # One-time weight staging (pad + stack + bf16 cast), NOT per forward call.
    staged = jax.block_until_ready(prepare_params(params))

    forward = jax.jit(custom_model_forward)
    y = jax.block_until_ready(forward(x, *staged))

    y_ref = _reference_forward(x, params)
    assert y.shape == (batch, 1), y.shape
    assert y.dtype == jnp.float32, y.dtype
    # bf16 MXU operands are now the only precision loss (f32 narrow output, exact recip).
    assert jnp.max(jnp.abs(y - y_ref)) < 2e-2, "mismatch vs f32 reference"

    print("KERNEL_OK")
</pallas_src>

<mosaic_0001>
module attributes {stable_mosaic.version = 11 : i64} {
  func.func @_mlp_kernel(%arg0: i32, %arg1: memref<8x16xf32, #tpu.memory_space<vmem>>, %arg2: memref<16x128xbf16, #tpu.memory_space<vmem>>, %arg3: memref<3x128x128xbf16, #tpu.memory_space<vmem>>, %arg4: memref<4x1x128xf32, #tpu.memory_space<vmem>>, %arg5: memref<1x128xf32, #tpu.memory_space<vmem>>, %arg6: memref<1x1xf32, #tpu.memory_space<vmem>>, %arg7: memref<8x1xf32, #tpu.memory_space<vmem>>) attributes {dimension_semantics = [#tpu.dimension_semantics<parallel>], iteration_bounds = array<i64: 1>, scalar_prefetch = 0 : i64, scratch_operands = 0 : i64, tpu.core_type = #tpu.core_type<tc>, window_params = [{transform_indices = @transform_0, window_bounds = array<i64: 8, 16>}, {pipeline_mode = #tpu.pipeline_mode<synchronous>, transform_indices = @transform_1, window_bounds = array<i64: 16, 128>}, {pipeline_mode = #tpu.pipeline_mode<synchronous>, transform_indices = @transform_2, window_bounds = array<i64: 3, 128, 128>}, {pipeline_mode = #tpu.pipeline_mode<synchronous>, transform_indices = @transform_3, window_bounds = array<i64: 4, 1, 128>}, {pipeline_mode = #tpu.pipeline_mode<synchronous>, transform_indices = @transform_4, window_bounds = array<i64: 1, 128>}, {pipeline_mode = #tpu.pipeline_mode<synchronous>, transform_indices = @transform_5, window_bounds = array<i64: 1, 1>}, {transform_indices = @transform_6, window_bounds = array<i64: 8, 1>}]} {
    %c0 = arith.constant 0 : index
    %c0_0 = arith.constant 0 : index
    %0 = vector.load %arg1[%c0, %c0_0] : memref<8x16xf32, #tpu.memory_space<vmem>>, vector<8x16xf32>
    %1 = arith.truncf %0 : vector<8x16xf32> to vector<8x16xbf16>
    %c0_1 = arith.constant 0 : index
    %c0_2 = arith.constant 0 : index
    %2 = vector.load %arg2[%c0_1, %c0_2] : memref<16x128xbf16, #tpu.memory_space<vmem>>, vector<16x128xbf16>
    %cst = arith.constant dense<0.000000e+00> : vector<8x128xf32>
    %3 = tpu.matmul %1, %2, %cst {dimension_numbers = #tpu.dot_dimension_numbers<[1], [0], [0], [1], [0, 0, 1, 1], [], []>} : vector<8x16xbf16>, vector<16x128xbf16>, vector<8x128xf32> -> vector<8x128xf32>
    %c0_3 = arith.constant 0 : index
    %c0_4 = arith.constant 0 : index
    %c0_5 = arith.constant 0 : index
    %4 = vector.load %arg4[%c0_3, %c0_4, %c0_5] : memref<4x1x128xf32, #tpu.memory_space<vmem>>, vector<1x1x128xf32>
    %5 = vector.shape_cast %4 : vector<1x1x128xf32> to vector<1x128xf32>
    %6 = vector.broadcast %5 : vector<1x128xf32> to vector<8x128xf32>
    %7 = arith.addf %3, %6 : vector<8x128xf32>
    %cst_6 = arith.constant 0.000000e+00 : f32
    %8 = vector.broadcast %cst_6 : f32 to vector<8x128xf32>
    %9 = arith.maximumf %7, %8 : vector<8x128xf32>
    %10 = arith.truncf %9 : vector<8x128xf32> to vector<8x128xbf16>
    %c0_7 = arith.constant 0 : index
    %c0_8 = arith.constant 0 : index
    %c0_9 = arith.constant 0 : index
    %11 = vector.load %arg3[%c0_7, %c0_8, %c0_9] : memref<3x128x128xbf16, #tpu.memory_space<vmem>>, vector<1x128x128xbf16>
    %12 = vector.shape_cast %11 : vector<1x128x128xbf16> to vector<128x128xbf16>
    %cst_10 = arith.constant dense<0.000000e+00> : vector<8x128xf32>
    %13 = tpu.matmul %10, %12, %cst_10 {dimension_numbers = #tpu.dot_dimension_numbers<[1], [0], [0], [1], [0, 0, 1, 1], [], []>} : vector<8x128xbf16>, vector<128x128xbf16>, vector<8x128xf32> -> vector<8x128xf32>
    %c1 = arith.constant 1 : index
    %c0_11 = arith.constant 0 : index
    %c0_12 = arith.constant 0 : index
    %14 = vector.load %arg4[%c1, %c0_11, %c0_12] : memref<4x1x128xf32, #tpu.memory_space<vmem>>, vector<1x1x128xf32>
    %15 = vector.shape_cast %14 : vector<1x1x128xf32> to vector<1x128xf32>
    %16 = vector.broadcast %15 : vector<1x128xf32> to vector<8x128xf32>
    %17 = arith.addf %13, %16 : vector<8x128xf32>
    %cst_13 = arith.constant 0.000000e+00 : f32
    %18 = vector.broadcast %cst_13 : f32 to vector<8x128xf32>
    %19 = arith.maximumf %17, %18 : vector<8x128xf32>
    %20 = arith.truncf %19 : vector<8x128xf32> to vector<8x128xbf16>
    %c1_14 = arith.constant 1 : index
    %c0_15 = arith.constant 0 : index
    %c0_16 = arith.constant 0 : index
    %21 = vector.load %arg3[%c1_14, %c0_15, %c0_16] : memref<3x128x128xbf16, #tpu.memory_space<vmem>>, vector<1x128x128xbf16>
    %22 = vector.shape_cast %21 : vector<1x128x128xbf16> to vector<128x128xbf16>
    %cst_17 = arith.constant dense<0.000000e+00> : vector<8x128xf32>
    %23 = tpu.matmul %20, %22, %cst_17 {dimension_numbers = #tpu.dot_dimension_numbers<[1], [0], [0], [1], [0, 0, 1, 1], [], []>} : vector<8x128xbf16>, vector<128x128xbf16>, vector<8x128xf32> -> vector<8x128xf32>
    %c2 = arith.constant 2 : index
    %c0_18 = arith.constant 0 : index
    %c0_19 = arith.constant 0 : index
    %24 = vector.load %arg4[%c2, %c0_18, %c0_19] : memref<4x1x128xf32, #tpu.memory_space<vmem>>, vector<1x1x128xf32>
    %25 = vector.shape_cast %24 : vector<1x1x128xf32> to vector<1x128xf32>
    %26 = vector.broadcast %25 : vector<1x128xf32> to vector<8x128xf32>
    %27 = arith.addf %23, %26 : vector<8x128xf32>
    %cst_20 = arith.constant 0.000000e+00 : f32
    %28 = vector.broadcast %cst_20 : f32 to vector<8x128xf32>
    %29 = arith.maximumf %27, %28 : vector<8x128xf32>
    %30 = arith.truncf %29 : vector<8x128xf32> to vector<8x128xbf16>
    %c2_21 = arith.constant 2 : index
    %c0_22 = arith.constant 0 : index
    %c0_23 = arith.constant 0 : index
    %31 = vector.load %arg3[%c2_21, %c0_22, %c0_23] : memref<3x128x128xbf16, #tpu.memory_space<vmem>>, vector<1x128x128xbf16>
    %32 = vector.shape_cast %31 : vector<1x128x128xbf16> to vector<128x128xbf16>
    %cst_24 = arith.constant dense<0.000000e+00> : vector<8x128xf32>
    %33 = tpu.matmul %30, %32, %cst_24 {dimension_numbers = #tpu.dot_dimension_numbers<[1], [0], [0], [1], [0, 0, 1, 1], [], []>} : vector<8x128xbf16>, vector<128x128xbf16>, vector<8x128xf32> -> vector<8x128xf32>
    %c3 = arith.constant 3 : index
    %c0_25 = arith.constant 0 : index
    %c0_26 = arith.constant 0 : index
    %34 = vector.load %arg4[%c3, %c0_25, %c0_26] : memref<4x1x128xf32, #tpu.memory_space<vmem>>, vector<1x1x128xf32>
    %35 = vector.shape_cast %34 : vector<1x1x128xf32> to vector<1x128xf32>
    %36 = vector.broadcast %35 : vector<1x128xf32> to vector<8x128xf32>
    %37 = arith.addf %33, %36 : vector<8x128xf32>
    %cst_27 = arith.constant 0.000000e+00 : f32
    %38 = vector.broadcast %cst_27 : f32 to vector<8x128xf32>
    %39 = arith.maximumf %37, %38 : vector<8x128xf32>
    %c0_28 = arith.constant 0 : index
    %c0_29 = arith.constant 0 : index
    %40 = vector.load %arg5[%c0_28, %c0_29] : memref<1x128xf32, #tpu.memory_space<vmem>>, vector<1x128xf32>
    %41 = vector.broadcast %40 : vector<1x128xf32> to vector<8x128xf32>
    %42 = arith.mulf %39, %41 : vector<8x128xf32>
    %cst_30 = arith.constant dense<0.000000e+00> : vector<8xf32>
    %43 = vector.multi_reduction <add>, %42, %cst_30 [1] : vector<8x128xf32> to vector<8xf32>
    %44 = vector.shape_cast %43 : vector<8xf32> to vector<8x1xf32>
    %c0_31 = arith.constant 0 : index
    %c0_32 = arith.constant 0 : index
    %45 = vector.load %arg6[%c0_31, %c0_32] : memref<1x1xf32, #tpu.memory_space<vmem>>, vector<1x1xf32>
    %46 = vector.broadcast %45 : vector<1x1xf32> to vector<8x1xf32>
    %47 = arith.addf %44, %46 : vector<8x1xf32>
    %cst_33 = arith.constant 0.000000e+00 : f32
    %48 = vector.broadcast %cst_33 : f32 to vector<8x1xf32>
    %49 = arith.subf %48, %47 : vector<8x1xf32>
    %50 = math.exp %49 : vector<8x1xf32>
    %cst_34 = arith.constant 1.000000e+00 : f32
    %51 = vector.broadcast %cst_34 : f32 to vector<8x1xf32>
    %52 = arith.addf %51, %50 : vector<8x1xf32>
    %53 = tpu.reciprocal %52 : vector<8x1xf32> -> vector<8x1xf32>
    %c0_35 = arith.constant 0 : index
    %c0_36 = arith.constant 0 : index
    %54 = vector.load %arg7[%c0_35, %c0_36] : memref<8x1xf32, #tpu.memory_space<vmem>>, vector<8x1xf32>
    tpu.vector_store %arg7[%c0_35, %c0_36], %53 {strides = array<i32>} : memref<8x1xf32, #tpu.memory_space<vmem>>, vector<8x1xf32>,
    return
  }
  func.func @transform_0(%arg0: i32) -> (i32, i32) {
    %c0_i32 = arith.constant 0 : i32
    %c0_i32_0 = arith.constant 0 : i32
    return %arg0, %c0_i32 : i32, i32
  }
  func.func @transform_1(%arg0: i32) -> (i32, i32) {
    %c0_i32 = arith.constant 0 : i32
    %c0_i32_0 = arith.constant 0 : i32
    %c0_i32_1 = arith.constant 0 : i32
    return %c0_i32, %c0_i32_0 : i32, i32
  }
  func.func @transform_2(%arg0: i32) -> (i32, i32, i32) {
    %c0_i32 = arith.constant 0 : i32
    %c0_i32_0 = arith.constant 0 : i32
    %c0_i32_1 = arith.constant 0 : i32
    %c0_i32_2 = arith.constant 0 : i32
    return %c0_i32, %c0_i32_0, %c0_i32_1 : i32, i32, i32
  }
  func.func @transform_3(%arg0: i32) -> (i32, i32, i32) {
    %c0_i32 = arith.constant 0 : i32
    %c0_i32_0 = arith.constant 0 : i32
    %c0_i32_1 = arith.constant 0 : i32
    %c0_i32_2 = arith.constant 0 : i32
    return %c0_i32, %c0_i32_0, %c0_i32_1 : i32, i32, i32
  }
  func.func @transform_4(%arg0: i32) -> (i32, i32) {
    %c0_i32 = arith.constant 0 : i32
    %c0_i32_0 = arith.constant 0 : i32
    %c0_i32_1 = arith.constant 0 : i32
    return %c0_i32, %c0_i32_0 : i32, i32
  }
  func.func @transform_5(%arg0: i32) -> (i32, i32) {
    %c0_i32 = arith.constant 0 : i32
    %c0_i32_0 = arith.constant 0 : i32
    %c0_i32_1 = arith.constant 0 : i32
    return %c0_i32, %c0_i32_0 : i32, i32
  }
  func.func @transform_6(%arg0: i32) -> (i32, i32) {
    %c0_i32 = arith.constant 0 : i32
    %c0_i32_0 = arith.constant 0 : i32
    return %arg0, %c0_i32 : i32, i32
  }
}

</mosaic_0001>

<llo_original>
// kernel: custom_model_forward.1
$region0: #{custom_model_forward.1}
  #allocation0 [shape = 'u32[]', space=smem, size = 0x4, offset = 0x4, fixed_abs, tag = 'smem constant byte address 0x4 - core index']
  #allocation1 [shape = 'u32[72,128]{1,0:T(1,128)}', space=vmem, size = 0x9000, scoped, tag = 'internal scratch']
  #allocation2 [shape = 'f32[1,1]{1,0:T(1,128)S(1)}', space=vmem, size = 0x200, scoped, tag = 'scoped memory for custom_model_forward.1']
  %s0 = inlined_call_operand.hbm [shape: f32[8,16], index: 0, kind: input, shape index: {}]
  %s1 = inlined_call_operand.hbm [shape: bf16[16,128], index: 1, kind: input, shape index: {}]
  %s2 = inlined_call_operand.hbm [shape: bf16[3,128,128], index: 2, kind: input, shape index: {}]
  %s3 = inlined_call_operand.vmem [shape: f32[4,1,128], index: 3, kind: input, shape index: {}]
  %s4 = inlined_call_operand.vmem [shape: f32[1,128], index: 4, kind: input, shape index: {}]
  %s5 = inlined_call_operand.<no memory space> [shape: f32[1,1], index: 5, kind: input, shape index: {}]
  %s6 = inlined_call_operand.vmem [shape: f32[8,1], index: 6, kind: output, shape index: {}]
  %s7 = sld [smem:[#allocation0]]
  $region46: #{custom_model_forward.1} parent=0
    _
  %s9 = ssub.s32 1, %s7
  %s10 = scalar_select 0, %s9, %s7
  %v11 = vstv %s5
  %12 = vst [vmem:[#allocation2] sm:$0x1] %v11
  $region1: #{custom_model_forward.1} parent=0
    #allocation3 [shape = 'u8[4096]{0}', space=vmem, size = 0x1000, scoped, tag = 'input window, operand 0, single buffered']
    #allocation4 [shape = 's32[1]{0}', space=sflag, size = 0x4, scoped, tag = 'scoped memory for custom_model_forward.1']
    #allocation5 [shape = 'u8[4096]{0}', space=vmem, size = 0x1000, scoped, tag = 'input window, operand 1, single buffered']
    #allocation6 [shape = 's32[1]{0}', space=sflag, size = 0x4, scoped, tag = 'scoped memory for custom_model_forward.1']
    #allocation7 [shape = 'u8[98304]{0}', space=vmem, size = 0x18000, scoped, tag = 'input window, operand 2, single buffered']
    %13 = vsyncpa [#allocation4], 0
    %14 = vsyncpa [#allocation6], 0
    // Predicated region
    $region2: #{custom_model_forward.1} parent=1 // pred_check
      _
    $region3: #{custom_model_forward.1} parent=1 // pred_check_branch
      %16 = sbr.rel (0) target = $region5
    $region4: #{custom_model_forward.1} parent=1 // pred_region
      %18 = vsyncadd [#allocation4], 0
      %s20 = sshll.u32 %s0, 4
      %s21 = int_to_ptr.hbm [resolvable:$true] %s20
      %s22 = sshll.u32 [#allocation3], 4
      %s23 = int_to_ptr.vmem [resolvable:$true] %s22
      %25 = dma.hbm_to_vmem [thread:$0]  %s21, 128, %s23, [#allocation4]
    $region5: #{custom_model_forward.1} parent=1 // pred_fallthru
      _
    // Predicated region
    $region6: #{custom_model_forward.1} parent=1 // pred_check
      _
    $region7: #{custom_model_forward.1} parent=1 // pred_check_branch
      %27 = sbr.rel (0) target = $region9
    $region8: #{custom_model_forward.1} parent=1 // pred_region
      %29 = vsyncadd [#allocation6], 0
      %s30 = sshll.u32 %s1, 4
      %s31 = int_to_ptr.hbm [resolvable:$true] %s30
      %s32 = sshll.u32 [#allocation5], 4
      %s33 = int_to_ptr.vmem [resolvable:$true] %s32
      %38 = dma.hbm_to_vmem [thread:$0]  %s31, 128, %s33, [#allocation6], 64, 64, 4
    $region9: #{custom_model_forward.1} parent=1 // pred_fallthru
      _
    // Predicated region
    $region10: #{custom_model_forward.1} parent=1 // pred_check
      _
    $region11: #{custom_model_forward.1} parent=1 // pred_check_branch
      %40 = sbr.rel (0) target = $region13
    $region12: #{custom_model_forward.1} parent=1 // pred_region
      %42 = vsyncadd [#allocation6], 0
      %s43 = sshll.u32 %s2, 4
      %s44 = int_to_ptr.hbm [resolvable:$true] %s43
      %s45 = sshll.u32 [#allocation7], 4
      %s46 = int_to_ptr.vmem [resolvable:$true] %s45
      %51 = dma.hbm_to_vmem [thread:$0]  %s44, 3072, %s46, [#allocation6], 64, 64, 4
    $region13: #{custom_model_forward.1} parent=1 // pred_fallthru
      _
    // Predicated region
    $region14: #{custom_model_forward.1} parent=1 // pred_check
      _
    $region15: #{custom_model_forward.1} parent=1 // pred_check_branch
      %53 = sbr.rel (0) target = $region17
    $region16: #{custom_model_forward.1} parent=1 // pred_region
      _
    $region17: #{custom_model_forward.1} parent=1 // pred_fallthru
      _
    // Predicated region
    $region18: #{custom_model_forward.1} parent=1 // pred_check
      _
    $region19: #{custom_model_forward.1} parent=1 // pred_check_branch
      %55 = sbr.rel (0) target = $region21
    $region20: #{custom_model_forward.1} parent=1 // pred_region
      _
    $region21: #{custom_model_forward.1} parent=1 // pred_fallthru
      _
    // Predicated region
    $region22: #{custom_model_forward.1} parent=1 // pred_check
      _
    $region23: #{custom_model_forward.1} parent=1 // pred_check_branch
      %57 = sbr.rel (0) target = $region25
    $region24: #{custom_model_forward.1} parent=1 // pred_region
      _
    $region25: #{custom_model_forward.1} parent=1 // pred_fallthru
      _
    // Predicated region
    $region26: #{custom_model_forward.1} parent=1 // pred_check
      _
    $region27: #{custom_model_forward.1} parent=1 // pred_check_branch
      %59 = sbr.rel (0) target = $region29
    $region28: #{custom_model_forward.1} parent=1 // pred_region
      %61 = dma.done [#allocation4], 128
    $region29: #{custom_model_forward.1} parent=1 // pred_fallthru
      _
    // Predicated region
    $region30: #{custom_model_forward.1} parent=1 // pred_check
      _
    $region31: #{custom_model_forward.1} parent=1 // pred_check_branch
      %63 = sbr.rel (0) target = $region33
    $region32: #{custom_model_forward.1} parent=1 // pred_region
      %65 = dma.done [#allocation6], 128
    $region33: #{custom_model_forward.1} parent=1 // pred_fallthru
      _
    // Predicated region
    $region34: #{custom_model_forward.1} parent=1 // pred_check
      _
    $region35: #{custom_model_forward.1} parent=1 // pred_check_branch
      %67 = sbr.rel (0) target = $region37
    $region36: #{custom_model_forward.1} parent=1 // pred_region
      %69 = dma.done [#allocation6], 3072
    $region37: #{custom_model_forward.1} parent=1 // pred_fallthru
      _
    %v71 = vld [vmem:[#allocation3] sm:$0xff]
    %v72 = vpack.c.bf16 %v71, %v71
    %v73 = vld [vmem:[#allocation5] sm:$0xf]
    %v74 = vld [vmem:[#allocation5 + $0x4] sm:$0xf]
    %v75 = vld [vmem:[%s3] sm:$0x1]
    %v77 = vperm.slane %v75, 0
    %v81 = vunpack.c.l.b16 %v73
    %v82 = vunpack.c.l.b16 %v74
    %v83 = vpack.c.b16 %v82, %v81
    %vm85 = vcmask 130048
    %v87 = vsel %vm85, %v72, 0
    %89 = vmatpush.bf16.msra.mxu0 0
    %90 = vmatpush.bf16.msra.mxu0 0
    %91 = vmatpush.bf16.msra.mxu0 0
    %92 = vmatpush.bf16.msra.mxu0 0
    %93 = vmatpush.bf16.msra.mxu0 0
    %94 = vmatpush.bf16.msra.mxu0 0
    %95 = vmatpush.bf16.msra.mxu0 0
    %96 = vmatpush.bf16.msra.mxu0 %v83
    %97 = vmatmul.bf16.gmra.mxu0 %v87
    %v98 = vpop.f32.mrf.mxu0
    %v99 = vadd.f32 %v77, %v98
    %v100 = vpop.f32.mrf.mxu0
    %101 = vdwg.mxu0
    %v102 = vmax.f32 %v99, 0.0
    %v103 = vpack.c.bf16 %v102, %v102
    %v104 = vld [vmem:[#allocation7] sm:$0xf]
    %v105 = vld [vmem:[#allocation7 + $0x4] sm:$0xf]
    %v106 = vld [vmem:[#allocation7 + $0x8] sm:$0xf]
    %v107 = vld [vmem:[#allocation7 + $0xc] sm:$0xf]
    %v108 = vld [vmem:[#allocation7 + $0x10] sm:$0xf]
    %v109 = vld [vmem:[#allocation7 + $0x14] sm:$0xf]
    %v110 = vld [vmem:[#allocation7 + $0x18] sm:$0xf]
    %v111 = vld [vmem:[#allocation7 + $0x1c] sm:$0xf]
    %v112 = vld [vmem:[#allocation7 + $0x20] sm:$0xf]
    %v113 = vld [vmem:[#allocation7 + $0x24] sm:$0xf]
    %v114 = vld [vmem:[#allocation7 + $0x28] sm:$0xf]
    %v115 = vld [vmem:[#allocation7 + $0x2c] sm:$0xf]
    %v116 = vld [vmem:[#allocation7 + $0x30] sm:$0xf]
    %v117 = vld [vmem:[#allocation7 + $0x34] sm:$0xf]
    %v118 = vld [vmem:[#allocation7 + $0x38] sm:$0xf]
    %v119 = vld [vmem:[#allocation7 + $0x3c] sm:$0xf]
    %s120 = scalar_lea.vmem %s3, 1
    %v121 = vld [vmem:[%s120] sm:$0x1]
    %v123 = vperm.slane %v121, 0
    %v141 = vunpack.c.l.b16 %v104
    %v142 = vunpack.c.l.b16 %v105
    %v143 = vunpack.c.l.b16 %v106
    %v144 = vunpack.c.l.b16 %v107
    %v145 = vunpack.c.l.b16 %v108
    %v146 = vunpack.c.l.b16 %v109
    %v147 = vunpack.c.l.b16 %v110
    %v148 = vunpack.c.l.b16 %v111
    %v149 = vunpack.c.l.b16 %v112
    %v150 = vunpack.c.l.b16 %v113
    %v151 = vunpack.c.l.b16 %v114
    %v152 = vunpack.c.l.b16 %v115
    %v153 = vunpack.c.l.b16 %v116
    %v154 = vunpack.c.l.b16 %v117
    %v155 = vunpack.c.l.b16 %v118
    %v156 = vunpack.c.l.b16 %v119
    %v157 = vpack.c.b16 %v142, %v141
    %v158 = vpack.c.b16 %v144, %v143
    %v159 = vpack.c.b16 %v146, %v145
    %v160 = vpack.c.b16 %v148, %v147
    %v161 = vpack.c.b16 %v150, %v149
    %v162 = vpack.c.b16 %v152, %v151
    %v163 = vpack.c.b16 %v154, %v153
    %v164 = vpack.c.b16 %v156, %v155
    %173 = vmatpush.bf16.msra.mxu0 %v164
    %174 = vmatpush.bf16.msra.mxu0 %v163
    %175 = vmatpush.bf16.msra.mxu0 %v162
    %176 = vmatpush.bf16.msra.mxu0 %v161
    %177 = vmatpush.bf16.msra.mxu0 %v160
    %178 = vmatpush.bf16.msra.mxu0 %v159
    %179 = vmatpush.bf16.msra.mxu0 %v158
    %180 = vmatpush.bf16.msra.mxu0 %v157
    %181 = vmatmul.bf16.gmra.mxu0 %v103
    %v182 = vpop.f32.mrf.mxu0
    %v183 = vadd.f32 %v123, %v182
    %v184 = vpop.f32.mrf.mxu0
    %185 = vdwg.mxu0
    %v186 = vmax.f32 %v183, 0.0
    %v187 = vpack.c.bf16 %v186, %v186
    %s188 = scalar_lea.vmem [#allocation7], 64
    %v189 = vld [vmem:[%s188] sm:$0xf]
    %v190 = vld [vmem:[%s188 + $0x4] sm:$0xf]
    %v191 = vld [vmem:[%s188 + $0x8] sm:$0xf]
    %v192 = vld [vmem:[%s188 + $0xc] sm:$0xf]
    %v193 = vld [vmem:[%s188 + $0x10] sm:$0xf]
    %v194 = vld [vmem:[%s188 + $0x14] sm:$0xf]
    %v195 = vld [vmem:[%s188 + $0x18] sm:$0xf]
    %v196 = vld [vmem:[%s188 + $0x1c] sm:$0xf]
    %v197 = vld [vmem:[%s188 + $0x20] sm:$0xf]
    %v198 = vld [vmem:[%s188 + $0x24] sm:$0xf]
    %v199 = vld [vmem:[%s188 + $0x28] sm:$0xf]
    %v200 = vld [vmem:[%s188 + $0x2c] sm:$0xf]
    %v201 = vld [vmem:[%s188 + $0x30] sm:$0xf]
    %v202 = vld [vmem:[%s188 + $0x34] sm:$0xf]
    %v203 = vld [vmem:[%s188 + $0x38] sm:$0xf]
    %v204 = vld [vmem:[%s188 + $0x3c] sm:$0xf]
    %s205 = scalar_lea.vmem %s3, 2
    %v206 = vld [vmem:[%s205] sm:$0x1]
    %v208 = vperm.slane %v206, 0
    %v226 = vunpack.c.l.b16 %v189
    %v227 = vunpack.c.l.b16 %v190
    %v228 = vunpack.c.l.b16 %v191
    %v229 = vunpack.c.l.b16 %v192
    %v230 = vunpack.c.l.b16 %v193
    %v231 = vunpack.c.l.b16 %v194
    %v232 = vunpack.c.l.b16 %v195
    %v233 = vunpack.c.l.b16 %v196
    %v234 = vunpack.c.l.b16 %v197
    %v235 = vunpack.c.l.b16 %v198
    %v236 = vunpack.c.l.b16 %v199
    %v237 = vunpack.c.l.b16 %v200
    %v238 = vunpack.c.l.b16 %v201
    %v239 = vunpack.c.l.b16 %v202
    %v240 = vunpack.c.l.b16 %v203
    %v241 = vunpack.c.l.b16 %v204
    %v242 = vpack.c.b16 %v227, %v226
    %v243 = vpack.c.b16 %v229, %v228
    %v244 = vpack.c.b16 %v231, %v230
    %v245 = vpack.c.b16 %v233, %v232
    %v246 = vpack.c.b16 %v235, %v234
    %v247 = vpack.c.b16 %v237, %v236
    %v248 = vpack.c.b16 %v239, %v238
    %v249 = vpack.c.b16 %v241, %v240
    %258 = vmatpush.bf16.msra.mxu0 %v249
    %259 = vmatpush.bf16.msra.mxu0 %v248
    %260 = vmatpush.bf16.msra.mxu0 %v247
    %261 = vmatpush.bf16.msra.mxu0 %v246
    %262 = vmatpush.bf16.msra.mxu0 %v245
    %263 = vmatpush.bf16.msra.mxu0 %v244
    %264 = vmatpush.bf16.msra.mxu0 %v243
    %265 = vmatpush.bf16.msra.mxu0 %v242
    %266 = vmatmul.bf16.gmra.mxu0 %v187
    %v267 = vpop.f32.mrf.mxu0
    %v268 = vadd.f32 %v208, %v267
    %v269 = vpop.f32.mrf.mxu0
    %270 = vdwg.mxu0
    %v271 = vmax.f32 %v268, 0.0
    %v272 = vpack.c.bf16 %v271, %v271
    %s273 = scalar_lea.vmem [#allocation7], 128
    %v274 = vld [vmem:[%s273] sm:$0xf]
    %v275 = vld [vmem:[%s273 + $0x4] sm:$0xf]
    %v276 = vld [vmem:[%s273 + $0x8] sm:$0xf]
    %v277 = vld [vmem:[%s273 + $0xc] sm:$0xf]
    %v278 = vld [vmem:[%s273 + $0x10] sm:$0xf]
    %v279 = vld [vmem:[%s273 + $0x14] sm:$0xf]
    %v280 = vld [vmem:[%s273 + $0x18] sm:$0xf]
    %v281 = vld [vmem:[%s273 + $0x1c] sm:$0xf]
    %v282 = vld [vmem:[%s273 + $0x20] sm:$0xf]
    %v283 = vld [vmem:[%s273 + $0x24] sm:$0xf]
    %v284 = vld [vmem:[%s273 + $0x28] sm:$0xf]
    %v285 = vld [vmem:[%s273 + $0x2c] sm:$0xf]
    %v286 = vld [vmem:[%s273 + $0x30] sm:$0xf]
    %v287 = vld [vmem:[%s273 + $0x34] sm:$0xf]
    %v288 = vld [vmem:[%s273 + $0x38] sm:$0xf]
    %v289 = vld [vmem:[%s273 + $0x3c] sm:$0xf]
    %s290 = scalar_lea.vmem %s3, 3
    %v291 = vld [vmem:[%s290] sm:$0x1]
    %v293 = vperm.slane %v291, 0
    %v311 = vunpack.c.l.b16 %v274
    %v312 = vunpack.c.l.b16 %v275
    %v313 = vunpack.c.l.b16 %v276
    %v314 = vunpack.c.l.b16 %v277
    %v315 = vunpack.c.l.b16 %v278
    %v316 = vunpack.c.l.b16 %v279
    %v317 = vunpack.c.l.b16 %v280
    %v318 = vunpack.c.l.b16 %v281
    %v319 = vunpack.c.l.b16 %v282
    %v320 = vunpack.c.l.b16 %v283
    %v321 = vunpack.c.l.b16 %v284
    %v322 = vunpack.c.l.b16 %v285
    %v323 = vunpack.c.l.b16 %v286
    %v324 = vunpack.c.l.b16 %v287
    %v325 = vunpack.c.l.b16 %v288
    %v326 = vunpack.c.l.b16 %v289
    %v327 = vpack.c.b16 %v312, %v311
    %v328 = vpack.c.b16 %v314, %v313
    %v329 = vpack.c.b16 %v316, %v315
    %v330 = vpack.c.b16 %v318, %v317
    %v331 = vpack.c.b16 %v320, %v319
    %v332 = vpack.c.b16 %v322, %v321
    %v333 = vpack.c.b16 %v324, %v323
    %v334 = vpack.c.b16 %v326, %v325
    %343 = vmatpush.bf16.msra.mxu0 %v334
    %344 = vmatpush.bf16.msra.mxu0 %v333
    %345 = vmatpush.bf16.msra.mxu0 %v332
    %346 = vmatpush.bf16.msra.mxu0 %v331
    %347 = vmatpush.bf16.msra.mxu0 %v330
    %348 = vmatpush.bf16.msra.mxu0 %v329
    %349 = vmatpush.bf16.msra.mxu0 %v328
    %350 = vmatpush.bf16.msra.mxu0 %v327
    %351 = vmatmul.bf16.gmra.mxu0 %v272
    %v352 = vpop.f32.mrf.mxu0
    %v353 = vadd.f32 %v293, %v352
    %v354 = vpop.f32.mrf.mxu0
    %355 = vdwg.mxu0
    %v356 = vmax.f32 %v353, 0.0
    %v357 = vld [vmem:[%s4] sm:$0x1]
    %v359 = vperm.slane %v357, 0
    %v361 = vmul.f32 %v356, %v359
    %362 = vadd.xlane.f32.xlu0 %v361
    %v363 = vpop.xlane.xlu0 %362
    %v364 = vld [vmem:[#allocation2] sm:$0x1]
    %v366 = vperm.slane %v364, 0
    %v368 = vadd.f32 %v363, %v366
    %v369 = vsub.f32 0.0, %v368
    %v370 = vmul.f32 %v369, 1.442695
    %v371 = vpow.pop %v370
    %v372 = vadd.f32 %v371, 1.0
    %v373 = vrcp.pop %v372
    %v374 = vmul.f32 %v372, %v373
    %v375 = vsub.f32 1.0, %v374
    %v376 = vmul.f32 %v373, %v375
    %v377 = vadd.f32 %v373, %v376
    %vm378 = vweird.f32 %v372
    %vm379 = vweird.f32 %v373
    %vm380 = vmor %vm378, %vm379
    %v381 = vsel %vm380, %v373, %v377
    %v382 = vand.u32 2147483647, %v372
    %vm383 = vcmp.eq.f32.partialorder %v382, 8.507059e+37
    %v384 = vand.u32 %v372, 2147483648
    %v385 = vor.u32 1.1754944e-38, %v384
    %v386 = vsel %vm383, %v385, %v381
    %vm387 = vcmask 7168
    %388 = vst.msk [vmem:[%s6] sm:$0xff] %vm387, %v386
    // Predicated region
    $region38: #{custom_model_forward.1} parent=1 // pred_check
      _
    $region39: #{custom_model_forward.1} parent=1 // pred_check_branch
      %390 = sbr.rel (0) target = $region41
    $region40: #{custom_model_forward.1} parent=1 // pred_region
      _
    $region41: #{custom_model_forward.1} parent=1 // pred_fallthru
      _
    // Predicated region
    $region42: #{custom_model_forward.1} parent=1 // pred_check
      _
    $region43: #{custom_model_forward.1} parent=1 // pred_check_branch
      %392 = sbr.rel (0) target = $region45
    $region44: #{custom_model_forward.1} parent=1 // pred_region
      _
    $region45: #{custom_model_forward.1} parent=1 // pred_fallthru
      _
    %393 = vsyncpa [#allocation4], 1
    %394 = vsyncpa [#allocation6], 1

</llo_original>
